<compile_context>
chip_gen: v5e
topology: v5e:2x2
jax: 0.10.0
libtpu: 0.0.40
codegen_flags: <defaults>
</compile_context>

<pallas_src>
import functools

import jax
import jax.numpy as jnp
from jax.experimental import pallas as pl
from jax.experimental.pallas import tpu as pltpu


def _round_up(x: int, m: int) -> int:
    return ((x + m - 1) // m) * m


def _ff_dropout_kernel(x_ref, w_ref, b_ref, *rest, dropout_p, apply_dropout):
    if apply_dropout:
        u_ref, o_ref, acc_ref = rest
    else:
        o_ref, acc_ref = rest

    k = pl.program_id(2)

    @pl.when(k == 0)
    def _():
        acc_ref[...] = jnp.zeros_like(acc_ref)

    # MXU matmul with f32 accumulation.
    acc_ref[...] += jnp.dot(
        x_ref[...], w_ref[...], preferred_element_type=jnp.float32
    )

    @pl.when(k == pl.num_programs(2) - 1)
    def _():
        y = acc_ref[...] + b_ref[...]  # (1, tn) bias broadcasts over tm rows
        if apply_dropout:
            # Dropout: keep with prob (1 - p), scale kept values by 1/(1-p).
            keep = u_ref[...] >= jnp.float32(dropout_p)
            scale = jnp.float32(1.0 / (1.0 - dropout_p))
            y = jnp.where(keep, y * scale, jnp.float32(0.0))
        o_ref[...] = jnp.maximum(y, 0.0).astype(o_ref.dtype)


def ff_dropout_layer(
    x,
    weight,
    bias,
    dropout_rand=None,
    *,
    dropout_p=0.2,
    training=True,
    tm_max=256,
    tn_max=256,
    tk_max=512,
):
    """x: (B, in), weight: (in, out), bias: (out,),
    dropout_rand: uniform [0,1) of shape (B, out) (required if training & p>0)."""
    B, in_size = x.shape
    assert weight.shape[0] == in_size
    out_size = weight.shape[1]

    apply_dropout = bool(training) and float(dropout_p) > 0.0
    if apply_dropout:
        assert dropout_rand is not None and dropout_rand.shape == (B, out_size)

    # Tile sizes (clamped to the padded problem size). Last two dims of every
    # block must be (8, 128)-aligned, hence the padding below.
    tm = min(tm_max, _round_up(B, 8))
    tk = min(tk_max, _round_up(in_size, 128))
    tn = min(tn_max, _round_up(out_size, 128))
    Mp = _round_up(B, tm)
    Kp = _round_up(in_size, tk)
    Np = _round_up(out_size, tn)

    xp = jnp.pad(x, ((0, Mp - B), (0, Kp - in_size)))
    wp = jnp.pad(weight, ((0, Kp - in_size), (0, Np - out_size)))
    bp = jnp.pad(bias.reshape(1, out_size), ((0, 0), (0, Np - out_size)))

    grid = (Mp // tm, Np // tn, Kp // tk)

    in_specs = [
        pl.BlockSpec((tm, tk), lambda i, j, k: (i, k)),   # x
        pl.BlockSpec((tk, tn), lambda i, j, k: (k, j)),   # W  (reused across i)
        pl.BlockSpec((1, tn), lambda i, j, k: (0, j)),    # bias
    ]
    inputs = [xp, wp, bp]
    if apply_dropout:
        up = jnp.pad(
            dropout_rand.astype(jnp.float32),
            ((0, Mp - B), (0, Np - out_size)),
        )
        in_specs.append(pl.BlockSpec((tm, tn), lambda i, j, k: (i, j)))  # rand
        inputs.append(up)

    kernel = functools.partial(
        _ff_dropout_kernel,
        dropout_p=float(dropout_p),
        apply_dropout=apply_dropout,
    )

    bytes_in = sum(int(a.size) * a.dtype.itemsize for a in inputs)
    bytes_out = Mp * Np * jnp.dtype(x.dtype).itemsize

    out_padded = pl.pallas_call(
        kernel,
        out_shape=jax.ShapeDtypeStruct((Mp, Np), x.dtype),
        grid=grid,
        in_specs=in_specs,
        out_specs=pl.BlockSpec((tm, tn), lambda i, j, k: (i, j)),
        scratch_shapes=[pltpu.VMEM((tm, tn), jnp.float32)],
        compiler_params=pltpu.CompilerParams(
            dimension_semantics=("parallel", "parallel", "arbitrary"),
        ),
        cost_estimate=pl.CostEstimate(
            flops=2 * Mp * Np * Kp,
            transcendentals=0,
            bytes_accessed=bytes_in + bytes_out,
        ),
    )(*inputs)

    return out_padded[:B, :out_size]


if __name__ == "__main__":
    # Small shapes consistent with the module: batch=8, input_size=32, output_size=32
    batch, input_size, output_size = 8, 32, 32
    dropout_p = 0.2

    key = jax.random.PRNGKey(0)
    kx, kw, kb, kd = jax.random.split(key, 4)

    x = jax.random.normal(kx, (batch, input_size), dtype=jnp.float32)

    # Deterministic init mimicking nn.Linear default: U(-1/sqrt(in), 1/sqrt(in))
    bound = 1.0 / jnp.sqrt(jnp.float32(input_size))
    weight = jax.random.uniform(
        kw, (input_size, output_size), minval=-bound, maxval=bound, dtype=jnp.float32
    )
    bias = jax.random.uniform(
        kb, (output_size,), minval=-bound, maxval=bound, dtype=jnp.float32
    )

    # Dropout randomness (uniform [0,1)) generated outside the kernel.
    u = jax.random.uniform(kd, (batch, output_size), dtype=jnp.float32)

    # Training mode (dropout active).
    out_train = jax.block_until_ready(
        ff_dropout_layer(
            x, weight, bias, dropout_rand=u, dropout_p=dropout_p, training=True
        )
    )
    assert out_train.shape == (batch, output_size)
    assert bool(jnp.all(out_train >= 0.0))

    # Exact reference for training mode (same mask).
    y_ref = x @ weight + bias
    keep = u >= dropout_p
    ref_train = jnp.maximum(jnp.where(keep, y_ref / (1.0 - dropout_p), 0.0), 0.0)
    assert jnp.allclose(out_train, ref_train, atol=1e-5, rtol=1e-5)

    # Eval mode (dropout disabled).
    out_eval = jax.block_until_ready(
        ff_dropout_layer(x, weight, bias, dropout_p=dropout_p, training=False)
    )
    ref_eval = jnp.maximum(y_ref, 0.0)
    assert jnp.allclose(out_eval, ref_eval, atol=1e-5, rtol=1e-5)

    print("KERNEL_OK")
</pallas_src>

<mosaic_0001>
module attributes {stable_mosaic.version = 11 : i64} {
  func.func @_ff_dropout_kernel(%arg0: i32, %arg1: i32, %arg2: i32, %arg3: memref<8x128xf32, #tpu.memory_space<vmem>>, %arg4: memref<128x128xf32, #tpu.memory_space<vmem>>, %arg5: memref<1x128xf32, #tpu.memory_space<vmem>>, %arg6: memref<8x128xf32, #tpu.memory_space<vmem>>, %arg7: memref<8x128xf32, #tpu.memory_space<vmem>>, %arg8: memref<8x128xf32, #tpu.memory_space<vmem>>) attributes {dimension_semantics = [#tpu.dimension_semantics<parallel>, #tpu.dimension_semantics<parallel>, #tpu.dimension_semantics<arbitrary>], iteration_bounds = array<i64: 1, 1, 1>, scalar_prefetch = 0 : i64, scratch_operands = 1 : i64, tpu.core_type = #tpu.core_type<tc>, window_params = [{transform_indices = @transform_0, window_bounds = array<i64: 8, 128>}, {transform_indices = @transform_1, window_bounds = array<i64: 128, 128>}, {transform_indices = @transform_2, window_bounds = array<i64: 1, 128>}, {transform_indices = @transform_3, window_bounds = array<i64: 8, 128>}, {transform_indices = @transform_4, window_bounds = array<i64: 8, 128>}]} {
    %c0_i32 = arith.constant 0 : i32
    %0 = arith.cmpi eq, %arg2, %c0_i32 : i32
    %1 = arith.extui %0 : i1 to i32
    %c0_i32_0 = arith.constant 0 : i32
    %2 = arith.cmpi ne, %1, %c0_i32_0 : i32
    scf.if %2 {
      %cst_10 = arith.constant 0.000000e+00 : f32
      %12 = vector.broadcast %cst_10 : f32 to vector<8x128xf32>
      %c0_11 = arith.constant 0 : index
      %c0_12 = arith.constant 0 : index
      %13 = vector.load %arg8[%c0_11, %c0_12] : memref<8x128xf32, #tpu.memory_space<vmem>>, vector<8x128xf32>
      tpu.vector_store %arg8[%c0_11, %c0_12], %12 {strides = array<i32>} : memref<8x128xf32, #tpu.memory_space<vmem>>, vector<8x128xf32>,
    } else {
    }
    %c0 = arith.constant 0 : index
    %c0_1 = arith.constant 0 : index
    %3 = vector.load %arg8[%c0, %c0_1] : memref<8x128xf32, #tpu.memory_space<vmem>>, vector<8x128xf32>
    %c0_2 = arith.constant 0 : index
    %c0_3 = arith.constant 0 : index
    %4 = vector.load %arg3[%c0_2, %c0_3] : memref<8x128xf32, #tpu.memory_space<vmem>>, vector<8x128xf32>
    %c0_4 = arith.constant 0 : index
    %c0_5 = arith.constant 0 : index
    %5 = vector.load %arg4[%c0_4, %c0_5] : memref<128x128xf32, #tpu.memory_space<vmem>>, vector<128x128xf32>
    %cst = arith.constant dense<0.000000e+00> : vector<8x128xf32>
    %6 = tpu.matmul %4, %5, %cst {dimension_numbers = #tpu.dot_dimension_numbers<[1], [0], [0], [1], [0, 0, 1, 1], [], []>} : vector<8x128xf32>, vector<128x128xf32>, vector<8x128xf32> -> vector<8x128xf32>
    %7 = arith.addf %3, %6 : vector<8x128xf32>
    %c0_6 = arith.constant 0 : index
    %c0_7 = arith.constant 0 : index
    %8 = vector.load %arg8[%c0_6, %c0_7] : memref<8x128xf32, #tpu.memory_space<vmem>>, vector<8x128xf32>
    tpu.vector_store %arg8[%c0_6, %c0_7], %7 {strides = array<i32>} : memref<8x128xf32, #tpu.memory_space<vmem>>, vector<8x128xf32>,
    %c0_i32_8 = arith.constant 0 : i32
    %9 = arith.cmpi eq, %arg2, %c0_i32_8 : i32
    %10 = arith.extui %9 : i1 to i32
    %c0_i32_9 = arith.constant 0 : i32
    %11 = arith.cmpi ne, %10, %c0_i32_9 : i32
    scf.if %11 {
      %c0_10 = arith.constant 0 : index
      %c0_11 = arith.constant 0 : index
      %12 = vector.load %arg8[%c0_10, %c0_11] : memref<8x128xf32, #tpu.memory_space<vmem>>, vector<8x128xf32>
      %c0_12 = arith.constant 0 : index
      %c0_13 = arith.constant 0 : index
      %13 = vector.load %arg5[%c0_12, %c0_13] : memref<1x128xf32, #tpu.memory_space<vmem>>, vector<1x128xf32>
      %14 = vector.broadcast %13 : vector<1x128xf32> to vector<8x128xf32>
      %15 = arith.addf %12, %14 : vector<8x128xf32>
      %c0_14 = arith.constant 0 : index
      %c0_15 = arith.constant 0 : index
      %16 = vector.load %arg6[%c0_14, %c0_15] : memref<8x128xf32, #tpu.memory_space<vmem>>, vector<8x128xf32>
      %cst_16 = arith.constant 2.000000e-01 : f32
      %17 = vector.broadcast %cst_16 : f32 to vector<8x128xf32>
      %18 = arith.cmpf oge, %16, %17 : vector<8x128xf32>
      %cst_17 = arith.constant 1.250000e+00 : f32
      %19 = vector.broadcast %cst_17 : f32 to vector<8x128xf32>
      %20 = arith.mulf %15, %19 : vector<8x128xf32>
      %cst_18 = arith.constant 0.000000e+00 : f32
      %21 = vector.broadcast %cst_18 : f32 to vector<8x128xf32>
      %22 = arith.select %18, %20, %21 : vector<8x128xi1>, vector<8x128xf32>
      %cst_19 = arith.constant 0.000000e+00 : f32
      %23 = vector.broadcast %cst_19 : f32 to vector<8x128xf32>
      %24 = arith.maximumf %22, %23 : vector<8x128xf32>
      %c0_20 = arith.constant 0 : index
      %c0_21 = arith.constant 0 : index
      %25 = vector.load %arg7[%c0_20, %c0_21] : memref<8x128xf32, #tpu.memory_space<vmem>>, vector<8x128xf32>
      tpu.vector_store %arg7[%c0_20, %c0_21], %24 {strides = array<i32>} : memref<8x128xf32, #tpu.memory_space<vmem>>, vector<8x128xf32>,
    } else {
    }
    return
  }
  func.func @transform_0(%arg0: i32, %arg1: i32, %arg2: i32) -> (i32, i32) {
    %c0_i32 = arith.constant 0 : i32
    return %arg0, %arg2 : i32, i32
  }
  func.func @transform_1(%arg0: i32, %arg1: i32, %arg2: i32) -> (i32, i32) {
    %c0_i32 = arith.constant 0 : i32
    return %arg2, %arg1 : i32, i32
  }
  func.func @transform_2(%arg0: i32, %arg1: i32, %arg2: i32) -> (i32, i32) {
    %c0_i32 = arith.constant 0 : i32
    %c0_i32_0 = arith.constant 0 : i32
    return %c0_i32, %arg1 : i32, i32
  }
  func.func @transform_3(%arg0: i32, %arg1: i32, %arg2: i32) -> (i32, i32) {
    %c0_i32 = arith.constant 0 : i32
    return %arg0, %arg1 : i32, i32
  }
  func.func @transform_4(%arg0: i32, %arg1: i32, %arg2: i32) -> (i32, i32) {
    %c0_i32 = arith.constant 0 : i32
    return %arg0, %arg1 : i32, i32
  }
}

</mosaic_0001>

<llo_original>
// kernel: tpu_custom_call.1
$region0: #{tpu_custom_call.1}
  #allocation0 [shape = 'u32[]', space=smem, size = 0x4, offset = 0x4, fixed_abs, tag = 'smem constant byte address 0x4 - core index']
  #allocation1 [shape = 'u32[72,128]{1,0:T(1,128)}', space=vmem, size = 0x9000, scoped, tag = 'internal scratch']
  #allocation2 [shape = 'f32[8,128]{1,0:T(8,128)}', space=vmem, size = 0x1000, scoped, tag = 'scratch operand']
  %s0 = inlined_call_operand.hbm [shape: f32[8,128], index: 0, kind: input, shape index: {}]
  %s1 = inlined_call_operand.hbm [shape: f32[128,128], index: 1, kind: input, shape index: {}]
  %s2 = inlined_call_operand.vmem [shape: f32[1,128], index: 2, kind: input, shape index: {}]
  %s3 = inlined_call_operand.hbm [shape: f32[8,128], index: 3, kind: input, shape index: {}]
  %s4 = inlined_call_operand.hbm [shape: f32[8,128], index: 4, kind: output, shape index: {}]
  %s5 = sld [smem:[#allocation0]]
  $region46: #{tpu_custom_call.1} parent=0
    _
  %s7 = ssub.s32 1, %s5
  %s8 = scalar_select 0, %s7, %s5
  $region1: #{tpu_custom_call.1} parent=0
    #allocation3 [shape = 'u8[4096]{0}', space=vmem, size = 0x1000, scoped, tag = 'input window, operand 0, single buffered']
    #allocation4 [shape = 's32[1]{0}', space=sflag, size = 0x4, scoped, tag = 'scoped memory for tpu_custom_call.1']
    #allocation5 [shape = 's32[1]{0}', space=sflag, size = 0x4, scoped, tag = 'scoped memory for tpu_custom_call.1']
    #allocation6 [shape = 'u8[65536]{0}', space=vmem, size = 0x10000, scoped, tag = 'input window, operand 1, single buffered']
    #allocation7 [shape = 's32[1]{0}', space=sflag, size = 0x4, scoped, tag = 'scoped memory for tpu_custom_call.1']
    #allocation8 [shape = 'u8[4096]{0}', space=vmem, size = 0x1000, scoped, tag = 'input window, operand 3, single buffered']
    #allocation9 [shape = 'u8[4096]{0}', space=vmem, size = 0x1000, scoped, tag = 'output window, operand 0, single buffered']
    %9 = vsyncpa [#allocation4], 0
    %10 = vsyncpa [#allocation7], 0
    %11 = vsyncpa [#allocation5], 0
    // Predicated region
    $region2: #{tpu_custom_call.1} parent=1 // pred_check
      _
    $region3: #{tpu_custom_call.1} parent=1 // pred_check_branch
      %13 = sbr.rel (0) target = $region5
    $region4: #{tpu_custom_call.1} parent=1 // pred_region
      %15 = vsyncadd [#allocation4], 0
      %s17 = sshll.u32 %s0, 4
      %s18 = int_to_ptr.hbm [resolvable:$true] %s17
      %s19 = sshll.u32 [#allocation3], 4
      %s20 = int_to_ptr.vmem [resolvable:$true] %s19
      %22 = dma.hbm_to_vmem [thread:$0]  %s18, 128, %s20, [#allocation4]
    $region5: #{tpu_custom_call.1} parent=1 // pred_fallthru
      _
    // Predicated region
    $region6: #{tpu_custom_call.1} parent=1 // pred_check
      _
    $region7: #{tpu_custom_call.1} parent=1 // pred_check_branch
      %24 = sbr.rel (0) target = $region9
    $region8: #{tpu_custom_call.1} parent=1 // pred_region
      %26 = vsyncadd [#allocation7], 0
      %s27 = sshll.u32 %s1, 4
      %s28 = int_to_ptr.hbm [resolvable:$true] %s27
      %s29 = sshll.u32 [#allocation6], 4
      %s30 = int_to_ptr.vmem [resolvable:$true] %s29
      %35 = dma.hbm_to_vmem [thread:$0]  %s28, 2048, %s30, [#allocation7], 128, 128, 8
    $region9: #{tpu_custom_call.1} parent=1 // pred_fallthru
      _
    // Predicated region
    $region10: #{tpu_custom_call.1} parent=1 // pred_check
      _
    $region11: #{tpu_custom_call.1} parent=1 // pred_check_branch
      %37 = sbr.rel (0) target = $region13
    $region12: #{tpu_custom_call.1} parent=1 // pred_region
      _
    $region13: #{tpu_custom_call.1} parent=1 // pred_fallthru
      _
    // Predicated region
    $region14: #{tpu_custom_call.1} parent=1 // pred_check
      _
    $region15: #{tpu_custom_call.1} parent=1 // pred_check_branch
      %39 = sbr.rel (0) target = $region17
    $region16: #{tpu_custom_call.1} parent=1 // pred_region
      %41 = vsyncadd [#allocation7], 0
      %s43 = sshll.u32 %s3, 4
      %s44 = int_to_ptr.hbm [resolvable:$true] %s43
      %s45 = sshll.u32 [#allocation8], 4
      %s46 = int_to_ptr.vmem [resolvable:$true] %s45
      %48 = dma.hbm_to_vmem [thread:$0]  %s44, 128, %s46, [#allocation7]
    $region17: #{tpu_custom_call.1} parent=1 // pred_fallthru
      _
    // Predicated region
    $region18: #{tpu_custom_call.1} parent=1 // pred_check
      _
    $region19: #{tpu_custom_call.1} parent=1 // pred_check_branch
      %50 = sbr.rel (0) target = $region21
    $region20: #{tpu_custom_call.1} parent=1 // pred_region
      %52 = dma.done [#allocation4], 128
    $region21: #{tpu_custom_call.1} parent=1 // pred_fallthru
      _
    // Predicated region
    $region22: #{tpu_custom_call.1} parent=1 // pred_check
      _
    $region23: #{tpu_custom_call.1} parent=1 // pred_check_branch
      %54 = sbr.rel (0) target = $region25
    $region24: #{tpu_custom_call.1} parent=1 // pred_region
      %56 = dma.done [#allocation7], 2048
    $region25: #{tpu_custom_call.1} parent=1 // pred_fallthru
      _
    // Predicated region
    $region26: #{tpu_custom_call.1} parent=1 // pred_check
      _
    $region27: #{tpu_custom_call.1} parent=1 // pred_check_branch
      %58 = sbr.rel (0) target = $region29
    $region28: #{tpu_custom_call.1} parent=1 // pred_region
      %60 = dma.done [#allocation7], 128
    $region29: #{tpu_custom_call.1} parent=1 // pred_fallthru
      _
    %p61 = scmp.eq.s32.totalorder 0, 0
    // Predicated region
    $region30: #{tpu_custom_call.1} parent=1 // pred_check
      %p62 = pneg %p61
    $region31: #{tpu_custom_call.1} parent=1 // pred_check_branch
      %64 = sbr.rel (%p62) target = $region33
    $region32: #{tpu_custom_call.1} parent=1 // pred_region
      %65 = vst [vmem:[#allocation2] sm:$0xff] 0.0
    $region33: #{tpu_custom_call.1} parent=1 // pred_fallthru
      _
    %v66 = vld [vmem:[#allocation2] sm:$0xff]
    %v67 = vld [vmem:[#allocation3] sm:$0xff]
    %v68 = vld [vmem:[#allocation6] sm:$0xff]
    %v69 = vld [vmem:[#allocation6 + $0x8] sm:$0xff]
    %v70 = vld [vmem:[#allocation6 + $0x10] sm:$0xff]
    %v71 = vld [vmem:[#allocation6 + $0x18] sm:$0xff]
    %v72 = vld [vmem:[#allocation6 + $0x20] sm:$0xff]
    %v73 = vld [vmem:[#allocation6 + $0x28] sm:$0xff]
    %v74 = vld [vmem:[#allocation6 + $0x30] sm:$0xff]
    %v75 = vld [vmem:[#allocation6 + $0x38] sm:$0xff]
    %v76 = vld [vmem:[#allocation6 + $0x40] sm:$0xff]
    %v77 = vld [vmem:[#allocation6 + $0x48] sm:$0xff]
    %v78 = vld [vmem:[#allocation6 + $0x50] sm:$0xff]
    %v79 = vld [vmem:[#allocation6 + $0x58] sm:$0xff]
    %v80 = vld [vmem:[#allocation6 + $0x60] sm:$0xff]
    %v81 = vld [vmem:[#allocation6 + $0x68] sm:$0xff]
    %v82 = vld [vmem:[#allocation6 + $0x70] sm:$0xff]
    %v83 = vld [vmem:[#allocation6 + $0x78] sm:$0xff]
    %84 = vmatpush.msra.mxu0 %v83
    %85 = vmatpush.msra.mxu0 %v82
    %86 = vmatpush.msra.mxu0 %v81
    %87 = vmatpush.msra.mxu0 %v80
    %88 = vmatpush.msra.mxu0 %v79
    %89 = vmatpush.msra.mxu0 %v78
    %90 = vmatpush.msra.mxu0 %v77
    %91 = vmatpush.msra.mxu0 %v76
    %92 = vmatpush.msra.mxu0 %v75
    %93 = vmatpush.msra.mxu0 %v74
    %94 = vmatpush.msra.mxu0 %v73
    %95 = vmatpush.msra.mxu0 %v72
    %96 = vmatpush.msra.mxu0 %v71
    %97 = vmatpush.msra.mxu0 %v70
    %98 = vmatpush.msra.mxu0 %v69
    %99 = vmatpush.msra.mxu0 %v68
    %100 = vmatmul.f32.gmra.mxu0 %v67
    %v101 = vpop.f32.mrf.mxu0
    %v102 = vadd.f32 0.0, %v101
    %103 = vdwg.mxu0
    %v104 = vadd.f32 %v66, %v102
    %105 = vst [vmem:[#allocation2] sm:$0xff] %v104
    // Predicated region
    $region34: #{tpu_custom_call.1} parent=1 // pred_check
      %p106 = pneg %p61
    $region35: #{tpu_custom_call.1} parent=1 // pred_check_branch
      %108 = sbr.rel (%p106) target = $region37
    $region36: #{tpu_custom_call.1} parent=1 // pred_region
      %v109 = vld [vmem:[#allocation2] sm:$0xff]
      %v110 = vld [vmem:[%s2] sm:$0x1]
      %v112 = vperm.slane %v110, 0
      %v114 = vadd.f32 %v109, %v112
      %v115 = vld [vmem:[#allocation8] sm:$0xff]
      %vm116 = vcmp.ge.f32.partialorder %v115, 0.2
      %v117 = vmul.f32 %v114, 1.25
      %v118 = vsel %vm116, %v117, 0.0
      %v119 = vmax.f32 %v118, 0.0
      %120 = vst [vmem:[#allocation9] sm:$0xff] %v119
    $region37: #{tpu_custom_call.1} parent=1 // pred_fallthru
      _
    // Predicated region
    $region38: #{tpu_custom_call.1} parent=1 // pred_check
      _
    $region39: #{tpu_custom_call.1} parent=1 // pred_check_branch
      %122 = sbr.rel (0) target = $region41
    $region40: #{tpu_custom_call.1} parent=1 // pred_region
      %124 = vsyncadd [#allocation5], 0
      %s126 = sshll.u32 [#allocation9], 4
      %s127 = int_to_ptr.vmem [resolvable:$true] %s126
      %s128 = sshll.u32 %s4, 4
      %s129 = int_to_ptr.hbm [resolvable:$true] %s128
      %131 = dma.vmem_to_hbm [thread:$0]  %s127, 128, %s129, [#allocation5]
    $region41: #{tpu_custom_call.1} parent=1 // pred_fallthru
      _
    // Predicated region
    $region42: #{tpu_custom_call.1} parent=1 // pred_check
      _
    $region43: #{tpu_custom_call.1} parent=1 // pred_check_branch
      %133 = sbr.rel (0) target = $region45
    $region44: #{tpu_custom_call.1} parent=1 // pred_region
      %135 = dma.done [#allocation5], 128
    $region45: #{tpu_custom_call.1} parent=1 // pred_fallthru
      _
    %136 = vsyncpa [#allocation4], 1
    %137 = vsyncpa [#allocation7], 1
    %138 = vsyncpa [#allocation5], 1

</llo_original>
